<compile_context>
chip_gen: v7x
topology: tpu7x:2x2x1
jax: 0.10.0
libtpu: 0.0.40
codegen_flags: <defaults>
</compile_context>

<pallas_src>
import jax
import jax.numpy as jnp
from jax.experimental import pallas as pl
from jax.experimental.pallas import tpu as pltpu


def _conv1x1_kernel(x_ref, w_ref, b_ref, o_ref):
    # x_ref: (1, C_in, TL)   w_ref: (C_out, C_in)   b_ref: (C_out, 1)
    # o_ref: (1, C_out, TL)
    y = jnp.dot(w_ref[...], x_ref[0], preferred_element_type=jnp.float32)
    o_ref[0] = (y + b_ref[...]).astype(o_ref.dtype)


def _choose_tile(B, L, C_in, C_out, *, target_bytes, vmem_budget_bytes,
                 min_steps=8):
    """Pick the lane tile TL (multiple of 128, or the full L)."""
    bytes_per_col = (C_in + C_out) * 4          # fp32 x-column + out-column
    # Hit the per-step byte target (amortize ~0.35us/step pipeline overhead).
    tl = max(128, target_bytes // bytes_per_col)
    # Stay inside the VMEM budget for the double-buffered x/out tiles.
    tl = min(tl, max(128, vmem_budget_bytes // (2 * bytes_per_col)))
    # Keep >= ~min_steps grid steps when L allows it (pipeline depth, and
    # megacore sharding on v7x's two TensorCores).
    if B < min_steps and L >= 2 * 128:
        want_tiles = -(-min_steps // B)          # ceil(min_steps / B)
        tl_steps = (L // want_tiles) // 128 * 128
        if tl_steps >= 128:
            tl = min(tl, tl_steps)
    if tl >= L:
        return L                                 # full-L block (always legal)
    return max(128, (tl // 128) * 128)


def final_regress_pallas(x, weight, bias, *,
                         target_bytes=4 * 1024 * 1024,
                         vmem_budget_bytes=12 * 1024 * 1024):
    """Conv1d(kernel_size=1) forward.

    Args:
      x:      (B, C_in, L)        float32
      weight: (C_out, C_in) or (C_out, C_in, 1) float32 (PyTorch conv weight)
      bias:   (C_out,)            float32
    Returns:
      (B, C_out, L) float32
    """
    if weight.ndim == 3:                         # PyTorch conv weight (O, I, 1)
        weight = weight.reshape(weight.shape[0], weight.shape[1])
    B, C_in, L = x.shape
    C_out = weight.shape[0]
    bias2d = bias.reshape(C_out, 1)

    TL = _choose_tile(B, L, C_in, C_out,
                      target_bytes=target_bytes,
                      vmem_budget_bytes=vmem_budget_bytes)
    n_tiles = pl.cdiv(L, TL)

    # VMEM use: double-buffered x tile + out tile, plus (double-buffered)
    # resident weight and bias.  Only raise the scoped limit if needed
    # (v5e default is 16 MiB; v7x physical is 64 MiB).
    vmem_bytes = 4 * (2 * (C_in + C_out) * TL + 2 * (C_out * C_in + C_out))
    compiler_kwargs = dict(dimension_semantics=("parallel", "parallel"))
    if vmem_bytes > 12 * 1024 * 1024:
        compiler_kwargs["vmem_limit_bytes"] = int(
            min(2 * vmem_bytes, 64 * 1024 * 1024))

    cost = pl.CostEstimate(
        flops=2 * B * L * C_in * C_out,
        transcendentals=0,
        bytes_accessed=4 * (B * C_in * L + B * C_out * L + C_out * C_in + C_out),
    )

    return pl.pallas_call(
        _conv1x1_kernel,
        out_shape=jax.ShapeDtypeStruct((B, C_out, L), x.dtype),
        grid_spec=pltpu.PrefetchScalarGridSpec(
            num_scalar_prefetch=0,
            grid=(B, n_tiles),
            in_specs=[
                # x streams in its native layout, one batch x one L-tile per step.
                pl.BlockSpec((1, C_in, TL), lambda b, n: (b, 0, n)),
                # weight / bias: constant block index -> fetched once, resident.
                pl.BlockSpec((C_out, C_in), lambda b, n: (0, 0)),
                pl.BlockSpec((C_out, 1), lambda b, n: (0, 0)),
            ],
            out_specs=pl.BlockSpec((1, C_out, TL), lambda b, n: (b, 0, n)),
        ),
        compiler_params=pltpu.CompilerParams(**compiler_kwargs),
        cost_estimate=cost,
    )(x, weight, bias2d)


if __name__ == "__main__":
    # Small shapes consistent with the module: Conv1d input is (B, init_dim, L).
    B, init_dim, out_dim, L = 2, 32, 8, 16

    key = jax.random.PRNGKey(0)
    kx, kw, kb = jax.random.split(key, 3)

    x = jax.random.normal(kx, (B, init_dim, L), dtype=jnp.float32)

    # Deterministic parameter init mimicking PyTorch Conv1d default:
    # U(-bound, bound) with bound = 1/sqrt(fan_in), fan_in = init_dim * k (k=1).
    bound = 1.0 / (init_dim ** 0.5)
    weight = jax.random.uniform(kw, (out_dim, init_dim), dtype=jnp.float32,
                                minval=-bound, maxval=bound)
    bias = jax.random.uniform(kb, (out_dim,), dtype=jnp.float32,
                              minval=-bound, maxval=bound)

    fwd = jax.jit(final_regress_pallas)
    out = jax.block_until_ready(fwd(x, weight, bias))

    # Pure-JAX reference check (Conv1d k=1 == batched matmul + bias).
    ref = jnp.einsum("oc,bcl->bol", weight, x) + bias[None, :, None]
    assert out.shape == (B, out_dim, L)
    assert jnp.allclose(out, ref, atol=1e-5, rtol=1e-5)

    # Second check: L > TL with a partial (masked) last tile, exercising the
    # no-pad boundary path (TL forced to 128 via a tiny per-step byte target).
    L2 = 300
    x2 = jax.random.normal(kx, (B, init_dim, L2), dtype=jnp.float32)
    out2 = jax.block_until_ready(
        final_regress_pallas(x2, weight, bias, target_bytes=128 * (init_dim + out_dim) * 4))
    ref2 = jnp.einsum("oc,bcl->bol", weight, x2) + bias[None, :, None]
    assert out2.shape == (B, out_dim, L2)
    assert jnp.allclose(out2, ref2, atol=1e-5, rtol=1e-5)

    print("KERNEL_OK")
</pallas_src>

<mosaic_0001>
module attributes {stable_mosaic.version = 11 : i64} {
  func.func @_conv1x1_kernel(%arg0: i32, %arg1: i32, %arg2: memref<1x32x16xf32, #tpu.memory_space<vmem>>, %arg3: memref<8x32xf32, #tpu.memory_space<vmem>>, %arg4: memref<8x1xf32, #tpu.memory_space<vmem>>, %arg5: memref<1x8x16xf32, #tpu.memory_space<vmem>>) attributes {dimension_semantics = [#tpu.dimension_semantics<parallel>, #tpu.dimension_semantics<parallel>], iteration_bounds = array<i64: 2, 1>, scalar_prefetch = 0 : i64, scratch_operands = 0 : i64, tpu.core_type = #tpu.core_type<tc>, window_params = [{transform_indices = @transform_0, window_bounds = array<i64: 1, 32, 16>}, {pipeline_mode = #tpu.pipeline_mode<synchronous>, transform_indices = @transform_1, window_bounds = array<i64: 8, 32>}, {pipeline_mode = #tpu.pipeline_mode<synchronous>, transform_indices = @transform_2, window_bounds = array<i64: 8, 1>}, {transform_indices = @transform_3, window_bounds = array<i64: 1, 8, 16>}]} {
    %c0 = arith.constant 0 : index
    %c0_0 = arith.constant 0 : index
    %0 = vector.load %arg3[%c0, %c0_0] : memref<8x32xf32, #tpu.memory_space<vmem>>, vector<8x32xf32>
    %c0_1 = arith.constant 0 : index
    %c0_2 = arith.constant 0 : index
    %c0_3 = arith.constant 0 : index
    %1 = vector.load %arg2[%c0_1, %c0_2, %c0_3] : memref<1x32x16xf32, #tpu.memory_space<vmem>>, vector<1x32x16xf32>
    %2 = vector.shape_cast %1 : vector<1x32x16xf32> to vector<32x16xf32>
    %cst = arith.constant dense<0.000000e+00> : vector<8x16xf32>
    %3 = tpu.matmul %0, %2, %cst {dimension_numbers = #tpu.dot_dimension_numbers<[1], [0], [0], [1], [0, 0, 1, 1], [], []>} : vector<8x32xf32>, vector<32x16xf32>, vector<8x16xf32> -> vector<8x16xf32>
    %c0_4 = arith.constant 0 : index
    %c0_5 = arith.constant 0 : index
    %4 = vector.load %arg4[%c0_4, %c0_5] : memref<8x1xf32, #tpu.memory_space<vmem>>, vector<8x1xf32>
    %5 = vector.broadcast %4 : vector<8x1xf32> to vector<8x16xf32>
    %6 = arith.addf %3, %5 : vector<8x16xf32>
    %c0_6 = arith.constant 0 : index
    %c0_7 = arith.constant 0 : index
    %c0_8 = arith.constant 0 : index
    %7 = vector.load %arg5[%c0_6, %c0_7, %c0_8] : memref<1x8x16xf32, #tpu.memory_space<vmem>>, vector<1x8x16xf32>
    %8 = vector.shape_cast %7 : vector<1x8x16xf32> to vector<8x16xf32>
    %9 = vector.shape_cast %6 : vector<8x16xf32> to vector<1x8x16xf32>
    tpu.vector_store %arg5[%c0_6, %c0_7, %c0_8], %9 {strides = array<i32>} : memref<1x8x16xf32, #tpu.memory_space<vmem>>, vector<1x8x16xf32>,
    return
  }
  func.func @transform_0(%arg0: i32, %arg1: i32) -> (i32, i32, i32) {
    %c0_i32 = arith.constant 0 : i32
    %c0_i32_0 = arith.constant 0 : i32
    return %arg0, %c0_i32, %arg1 : i32, i32, i32
  }
  func.func @transform_1(%arg0: i32, %arg1: i32) -> (i32, i32) {
    %c0_i32 = arith.constant 0 : i32
    %c0_i32_0 = arith.constant 0 : i32
    %c0_i32_1 = arith.constant 0 : i32
    return %c0_i32, %c0_i32_0 : i32, i32
  }
  func.func @transform_2(%arg0: i32, %arg1: i32) -> (i32, i32) {
    %c0_i32 = arith.constant 0 : i32
    %c0_i32_0 = arith.constant 0 : i32
    %c0_i32_1 = arith.constant 0 : i32
    return %c0_i32, %c0_i32_0 : i32, i32
  }
  func.func @transform_3(%arg0: i32, %arg1: i32) -> (i32, i32, i32) {
    %c0_i32 = arith.constant 0 : i32
    %c0_i32_0 = arith.constant 0 : i32
    return %arg0, %c0_i32, %arg1 : i32, i32, i32
  }
}

</mosaic_0001>

<llo_original>
// kernel: final_regress_pallas.1
$region0: #{final_regress_pallas.1}
  #allocation0 [shape = 'u32[]', space=smem, size = 0x4, offset = 0x4, fixed_abs, tag = 'smem constant byte address 0x4 - core index']
  #allocation1 [shape = 'u32[144,128]{1,0:T(1,128)}', space=vmem, size = 0x12000, scoped, tag = 'internal scratch']
  %s0 = inlined_call_operand.vmem [shape: f32[2,32,16], index: 0, kind: input, shape index: {}]
  %s1 = inlined_call_operand.vmem [shape: f32[8,32], index: 1, kind: input, shape index: {}]
  %s2 = inlined_call_operand.vmem [shape: f32[8,1], index: 2, kind: input, shape index: {}]
  %s3 = inlined_call_operand.hbm [shape: f32[2,8,16], index: 3, kind: output, shape index: {}]
  %s4 = sld [smem:[#allocation0]]
  $region45: #{final_regress_pallas.1} parent=0
    _
  %s6 = ssub.s32 1, %s4
  %s7 = scalar_select 0, %s6, %s4
  $region1: #{final_regress_pallas.1} parent=0
    #allocation2 [shape = 'u8[8192]{0}', space=vmem, size = 0x2000, scoped, tag = 'output window, operand 0']
    #allocation3 [shape = 's32[2]{0}', space=sflag, size = 0x8, scoped, tag = 'scoped memory for final_regress_pallas.1']
    %8 = vsyncpa [#allocation3], 0
    %s9 = scalar_lea.sflag [#allocation3], 1
    %10 = vsyncpa %s9, 0
    loop: start=0, step=1, limit=4
    $region2: #{final_regress_pallas.1} parent=1 // loop_pre_header
      _
    $region3: #{final_regress_pallas.1} parent=1 // loop_header
      %s12 = sphi 0, %s16
      %p13 = scmp.ge.s32.totalorder %s12, 4
      %s19 = sphi 0, %s31
      %s20 = sphi 0, %s27
      %s21 = sphi 0, %s19
      %s22 = sphi 0, %s20
      %s23 = sphi 0, %s21
      %s24 = sphi 0, %s22
      %s36 = sphi 0, %s38
      %s39 = sphi 0, %s36
      %s40 = sphi 0, %s39
      %s56 = sphi 0, %s40
      %s60 = sphi 0, %s60
      %s62 = sphi 0, %s60
      %s63 = sphi 0, %s62
      %s77 = sphi 0, %s63
      %s81 = sphi 0, %s81
      %s83 = sphi 0, %s81
      %s84 = sphi 0, %s83
      %s98 = sphi 0, %s84
      %s106 = sphi 0, %s108
      %s109 = sphi 0, %s106
      %s110 = sphi 0, %s109
      %s126 = sphi 0, %s110
    $region4: #{final_regress_pallas.1} parent=1 // loop_header_branch
      %15 = sbr.rel (%p13) target = $region8
    $region5: #{final_regress_pallas.1} parent=1 // loop_body
      %s17 = ssub.s32 %s12, 1
      %s18 = ssub.s32 %s12, 2
      %s25 = sadd.s32 1, %s20
      %p26 = scmp.ge.s32.totalorder %s25, 1
      %s27 = scalar_select %p26, 0, %s25
      %s28 = sadd.s32 1, %s19
      %s29 = scalar_select %p26, %s28, %s19
      %p30 = scmp.ge.s32.totalorder %s29, 2
      %s31 = scalar_select %p30, 0, %s29
      %s32 = ssub.s32 %s19, %s31
      %s33 = ssub.s32 %s20, %s27
      %s34 = sor.u32 %s32, %s33
      %p35 = scmp.eq.s32.totalorder %s34, 0
      %s37 = sadd.s32 %s36, 1
      %s38 = scalar_select %p35, %s36, %s37
      %p41 = pneg %p35
      %p42 = scmp.eq.s32.totalorder %s12, 1
      %p43 = por %p41, %p42
      %p44 = scmp.ne.s32.totalorder %s36, %s39
      %p45 = scmp.eq.s32.totalorder %s12, 0
      %p46 = por %p44, %p45
      %p47 = scmp.ne.s32.totalorder %s36, %s39
      %p48 = scmp.eq.s32.totalorder %s17, 1
      %p49 = por %p47, %p48
      %p50 = scmp.ne.s32.totalorder %s39, %s40
      %p51 = scmp.eq.s32.totalorder %s17, 0
      %p52 = por %p50, %p51
      %p53 = scmp.ne.s32.totalorder %s39, %s40
      %p54 = scmp.eq.s32.totalorder %s18, 1
      %p55 = por %p53, %p54
      %p57 = scmp.ne.s32.totalorder %s40, %s56
      %p58 = scmp.eq.s32.totalorder %s18, 0
      %p59 = por %p57, %p58
      %s61 = sadd.s32 %s60, 1
      %p64 = scmp.eq.s32.totalorder %s12, 1
      %p65 = scmp.ne.s32.totalorder %s60, %s62
      %p66 = scmp.eq.s32.totalorder %s12, 0
      %p67 = por %p65, %p66
      %p68 = scmp.ne.s32.totalorder %s60, %s62
      %p69 = scmp.eq.s32.totalorder %s17, 1
      %p70 = por %p68, %p69
      %p71 = scmp.ne.s32.totalorder %s62, %s63
      %p72 = scmp.eq.s32.totalorder %s17, 0
      %p73 = por %p71, %p72
      %p74 = scmp.ne.s32.totalorder %s62, %s63
      %p75 = scmp.eq.s32.totalorder %s18, 1
      %p76 = por %p74, %p75
      %p78 = scmp.ne.s32.totalorder %s63, %s77
      %p79 = scmp.eq.s32.totalorder %s18, 0
      %p80 = por %p78, %p79
      %s82 = sadd.s32 %s81, 1
      %p85 = scmp.eq.s32.totalorder %s12, 1
      %p86 = scmp.ne.s32.totalorder %s81, %s83
      %p87 = scmp.eq.s32.totalorder %s12, 0
      %p88 = por %p86, %p87
      %p89 = scmp.ne.s32.totalorder %s81, %s83
      %p90 = scmp.eq.s32.totalorder %s17, 1
      %p91 = por %p89, %p90
      %p92 = scmp.ne.s32.totalorder %s83, %s84
      %p93 = scmp.eq.s32.totalorder %s17, 0
      %p94 = por %p92, %p93
      %p95 = scmp.ne.s32.totalorder %s83, %s84
      %p96 = scmp.eq.s32.totalorder %s18, 1
      %p97 = por %p95, %p96
      %p99 = scmp.ne.s32.totalorder %s84, %s98
      %p100 = scmp.eq.s32.totalorder %s18, 0
      %p101 = por %p99, %p100
      %s102 = ssub.s32 %s19, %s31
      %s103 = ssub.s32 %s20, %s27
      %s104 = sor.u32 %s102, %s103
      %p105 = scmp.eq.s32.totalorder %s104, 0
      %s107 = sadd.s32 %s106, 1
      %s108 = scalar_select %p105, %s106, %s107
      %p111 = pneg %p105
      %p112 = scmp.eq.s32.totalorder %s12, 1
      %p113 = por %p111, %p112
      %p114 = scmp.ne.s32.totalorder %s106, %s109
      %p115 = scmp.eq.s32.totalorder %s12, 0
      %p116 = por %p114, %p115
      %p117 = scmp.ne.s32.totalorder %s106, %s109
      %p118 = scmp.eq.s32.totalorder %s17, 1
      %p119 = por %p117, %p118
      %p120 = scmp.ne.s32.totalorder %s109, %s110
      %p121 = scmp.eq.s32.totalorder %s17, 0
      %p122 = por %p120, %p121
      %p123 = scmp.ne.s32.totalorder %s109, %s110
      %p124 = scmp.eq.s32.totalorder %s18, 1
      %p125 = por %p123, %p124
      %p127 = scmp.ne.s32.totalorder %s110, %s126
      %p128 = scmp.eq.s32.totalorder %s18, 0
      %p129 = por %p127, %p128
      %p130 = scmp.le.s32.totalorder 1, %s12
      %p131 = scmp.lt.s32.totalorder %s12, 3
      %p132 = pnand %p130, %p131
      %p133 = pneg %p132
      // Predicated region
      $region9: #{final_regress_pallas.1} parent=5 // pred_check
        _
      $region10: #{final_regress_pallas.1} parent=5 // pred_check_branch
        %135 = sbr.rel (%p132) target = $region12
      $region11: #{final_regress_pallas.1} parent=5 // pred_region
        %s136 = ssub.s32 %s12, 1
        // Predicated region
        $region13: #{final_regress_pallas.1} parent=11 // pred_check
          %p137 = pneg %p73
        $region14: #{final_regress_pallas.1} parent=11 // pred_check_branch
          %139 = sbr.rel (%p137) target = $region16
        $region15: #{final_regress_pallas.1} parent=11 // pred_region
          _
        $region16: #{final_regress_pallas.1} parent=11 // pred_fallthru
          _
        // Predicated region
        $region17: #{final_regress_pallas.1} parent=11 // pred_check
          %p140 = pneg %p94
        $region18: #{final_regress_pallas.1} parent=11 // pred_check_branch
          %142 = sbr.rel (%p140) target = $region20
        $region19: #{final_regress_pallas.1} parent=11 // pred_region
          _
        $region20: #{final_regress_pallas.1} parent=11 // pred_fallthru
          _
      $region12: #{final_regress_pallas.1} parent=5 // pred_fallthru
        _
      %p143 = scmp.lt.s32.totalorder %s12, 2
      // Predicated region
      $region21: #{final_regress_pallas.1} parent=5 // pred_check
        %p144 = pneg %p143
      $region22: #{final_regress_pallas.1} parent=5 // pred_check_branch
        %146 = sbr.rel (%p144) target = $region24
      $region23: #{final_regress_pallas.1} parent=5 // pred_region
        // Predicated region
        $region25: #{final_regress_pallas.1} parent=23 // pred_check
          %p147 = pneg %p46
        $region26: #{final_regress_pallas.1} parent=23 // pred_check_branch
          %149 = sbr.rel (%p147) target = $region28
        $region27: #{final_regress_pallas.1} parent=23 // pred_region
          %p150 = scmp.lt.s32.totalorder %s19, 1
          %s151 = scalar_select %p150, %s19, 1
          %p152 = scmp.lt.s32.totalorder %s20, 0
          %s153 = scalar_select %p152, %s20, 0
          %s154 = smul.addr %s151, 4
          %s155 = sadd.s32 %s153, %s154
          %s156 = smul.addr %s155, 8
          %s157 = scalar_lea.vmem %s0, %s156
        $region28: #{final_regress_pallas.1} parent=23 // pred_fallthru
          _
      $region24: #{final_regress_pallas.1} parent=5 // pred_fallthru
        _
      %p158 = scmp.le.s32.totalorder 1, %s12
      %p159 = scmp.lt.s32.totalorder %s12, 3
      %p160 = pnand %p158, %p159
      %p161 = pneg %p160
      // Predicated region
      $region29: #{final_regress_pallas.1} parent=5 // pred_check
        _
      $region30: #{final_regress_pallas.1} parent=5 // pred_check_branch
        %163 = sbr.rel (%p160) target = $region32
      $region31: #{final_regress_pallas.1} parent=5 // pred_region
        %s164 = ssub.s32 %s12, 1
        %p165 = scmp.lt.s32.totalorder %s21, 1
        %s166 = scalar_select %p165, %s21, 1
        %p167 = scmp.lt.s32.totalorder %s22, 0
        %s168 = scalar_select %p167, %s22, 0
        %s169 = smul.addr %s166, 4
        %s170 = sadd.s32 %s168, %s169
        %s171 = smul.addr %s170, 8
        %s172 = scalar_lea.vmem %s0, %s171
        %p173 = pneg %p52
        %p174 = pneg %p49
        %p175 = pneg %p73
        %p176 = pneg %p70
        %p177 = pneg %p94
        %p178 = pneg %p91
        %p179 = pneg %p122
        %p180 = pneg %p119
        %s181 = sand.u32 %s109, 1
        %s182 = scalar_lea.sflag [#allocation3], %s181
        %s183 = sand.u32 %s109, 1
        %s184 = smul.addr %s183, 8
        %s185 = scalar_lea.vmem [#allocation2], %s184
        %p186 = scmp.lt.s32.totalorder %s21, 1
        %s187 = scalar_select %p186, %s21, 1
        %p188 = scmp.lt.s32.totalorder %s22, 0
        %s189 = scalar_select %p188, %s22, 0
        %s190 = smul.addr %s187, 4
        %s191 = sadd.s32 %s189, %s190
        %s192 = smul.addr %s191, 8
        %s193 = scalar_lea.vmem %s0, %s192
        %v194 = vld [vmem:[%s1] sm:$0xff]
        %v195 = vld [vmem:[%s193] sm:$0xff]
        %v196 = vld [vmem:[%s193 + $0x8] sm:$0xff]
        %v197 = vld [vmem:[%s193 + $0x10] sm:$0xff]
        %v198 = vld [vmem:[%s193 + $0x18] sm:$0xff]
        %v199 = vld [vmem:[%s2] sm:$0xff]
        %201 = vset.pattern.permute.xlu0 0
        %202 = vperm.xlu0 %201, %v199
        %v203 = vpop.permute.xlu0 %202
        %vm205 = vcmask 261120
        %v207 = vsel %vm205, %v194, 0
        %209 = vmatprep.subr.mxu0 0.0
        %210 = vmatpush1.msra.mxu0 %v195
        %211 = vmatprep.subr.mxu0 0.0
        %212 = vmatpush1.msra.mxu0 %v196
        %213 = vmatprep.subr.mxu0 0.0
        %214 = vmatpush1.msra.mxu0 %v197
        %215 = vmatprep.subr.mxu0 0.0
        %216 = vmatpush1.msra.mxu0 %v198
        %217 = vmatprep.subr.mxu0 0.0
        %218 = vmatpush1.msra.mxu0 0.0
        %219 = vmatprep.subr.mxu0 0.0
        %220 = vmatpush1.msra.mxu0 0.0
        %221 = vmatprep.subr.mxu0 0.0
        %222 = vmatpush1.msra.mxu0 0.0
        %223 = vmatprep.subr.mxu0 0.0
        %224 = vmatpush1.msra.mxu0 0.0
        %225 = vmatprep.subr.mxu0 0.0
        %226 = vmatpush1.msra.mxu0 0.0
        %227 = vmatprep.subr.mxu0 0.0
        %228 = vmatpush1.msra.mxu0 0.0
        %229 = vmatprep.subr.mxu0 0.0
        %230 = vmatpush1.msra.mxu0 0.0
        %231 = vmatprep.subr.mxu0 0.0
        %232 = vmatpush1.msra.mxu0 0.0
        %233 = vmatprep.subr.mxu0 0.0
        %234 = vmatpush1.msra.mxu0 0.0
        %235 = vmatprep.subr.mxu0 0.0
        %236 = vmatpush1.msra.mxu0 0.0
        %237 = vmatprep.subr.mxu0 0.0
        %238 = vmatpush1.msra.mxu0 0.0
        %239 = vmatprep.subr.mxu0 0.0
        %240 = vmatpush1.msra.mxu0 0.0
        %241 = vmatprep.subr.mxu0 0.0
        %242 = vmatpush1.msra.mxu0 0.0
        %243 = vmatprep.subr.mxu0 0.0
        %244 = vmatpush1.msra.mxu0 0.0
        %245 = vmatprep.subr.mxu0 0.0
        %246 = vmatpush1.msra.mxu0 0.0
        %247 = vmatprep.subr.mxu0 0.0
        %248 = vmatpush1.msra.mxu0 0.0
        %249 = vmatprep.subr.mxu0 0.0
        %250 = vmatpush1.msra.mxu0 0.0
        %251 = vmatprep.subr.mxu0 0.0
        %252 = vmatpush1.msra.mxu0 0.0
        %253 = vmatprep.subr.mxu0 0.0
        %254 = vmatpush1.msra.mxu0 0.0
        %255 = vmatprep.subr.mxu0 0.0
        %256 = vmatpush1.msra.mxu0 0.0
        %257 = vmatprep.subr.mxu0 0.0
        %258 = vmatpush1.msra.mxu0 0.0
        %259 = vmatprep.subr.mxu0 0.0
        %260 = vmatpush1.msra.mxu0 0.0
        %261 = vmatprep.subr.mxu0 0.0
        %262 = vmatpush1.msra.mxu0 0.0
        %263 = vmatprep.subr.mxu0 0.0
        %264 = vmatpush1.msra.mxu0 0.0
        %265 = vmatprep.subr.mxu0 0.0
        %266 = vmatpush1.msra.mxu0 0.0
        %267 = vmatprep.subr.mxu0 0.0
        %268 = vmatpush1.msra.mxu0 0.0
        %269 = vmatprep.subr.mxu0 0.0
        %270 = vmatpush1.msra.mxu0 0.0
        %271 = vmatprep.subr.mxu0 0.0
        %272 = vmatpush1.msra.mxu0 0.0
        %273 = vmatprep.mubr.f32.mxu0 0.0
        %274 = vmatmul.mubr.f32.gmra.mrb[0].mxu0 %v207
        %v275 = vpop.f32.mrb[0].mxu0
        %v276 = vadd.f32 %v203, %v275
        %v277 = vpop.f32.mrb[0].mxu0
        %278 = vdwg.mxu0
        %vm279 = vcmask 130048
        %280 = vst.msk [vmem:[%s185] sm:$0xff] %vm279, %v276
        %s281 = sand.u32 %s109, 1
        %s282 = scalar_lea.sflag [#allocation3], %s281
        %s283 = sand.u32 %s109, 1
        %s284 = smul.addr %s283, 8
        %s285 = scalar_lea.vmem [#allocation2], %s284
        // Predicated region
        $region33: #{final_regress_pallas.1} parent=31 // pred_check
          %p286 = pneg %p119
        $region34: #{final_regress_pallas.1} parent=31 // pred_check_branch
          %288 = sbr.rel (%p286) target = $region36
        $region35: #{final_regress_pallas.1} parent=31 // pred_region
          %s290 = ssub.s32 128, 128
          %291 = vsyncadd %s282, %s290
          %s292 = sadd.s32 %s22, %s21
          %s293 = smul.addr %s292, 128
          %s294 = scalar_lea.hbm %s3, %s293
          %s296 = sshll.u32 %s285, 4
          %s297 = int_to_ptr.vmem [resolvable:$true] %s296
          %299 = dma.vmem_to_hbm [thread:$0]  %s297, 128, %s294, %s282
        $region36: #{final_regress_pallas.1} parent=31 // pred_fallthru
          _
      $region32: #{final_regress_pallas.1} parent=5 // pred_fallthru
        _
      %p300 = scmp.le.s32.totalorder 2, %s12
      // Predicated region
      $region37: #{final_regress_pallas.1} parent=5 // pred_check
        %p301 = pneg %p300
      $region38: #{final_regress_pallas.1} parent=5 // pred_check_branch
        %303 = sbr.rel (%p301) target = $region40
      $region39: #{final_regress_pallas.1} parent=5 // pred_region
        %s304 = ssub.s32 %s12, 2
        // Predicated region
        $region41: #{final_regress_pallas.1} parent=39 // pred_check
          %p305 = pneg %p125
        $region42: #{final_regress_pallas.1} parent=39 // pred_check_branch
          %307 = sbr.rel (%p305) target = $region44
        $region43: #{final_regress_pallas.1} parent=39 // pred_region
          %s308 = sand.u32 %s110, 1
          %s309 = scalar_lea.sflag [#allocation3], %s308
          %s310 = sand.u32 %s110, 1
          %s311 = smul.addr %s310, 8
          %s312 = scalar_lea.vmem [#allocation2], %s311
          %313 = dma.done %s309, 128
        $region44: #{final_regress_pallas.1} parent=39 // pred_fallthru
          _
      $region40: #{final_regress_pallas.1} parent=5 // pred_fallthru
        _
    $region6: #{final_regress_pallas.1} parent=1 // loop_footer
      %s16 = sadd.s32 1, %s12
    $region7: #{final_regress_pallas.1} parent=1 // loop_footer_branch
      %11 = sbr.rel target = $region3
    $region8: #{final_regress_pallas.1} parent=1 // loop_exit
      _
    %314 = vsyncpa [#allocation3], 1
    %s315 = scalar_lea.sflag [#allocation3], 1
    %316 = vsyncpa %s315, 1

</llo_original>
